<compile_context>
chip_gen: v7x
topology: tpu7x:2x2x1
jax: 0.10.0
libtpu: 0.0.40
codegen_flags: <defaults>
</compile_context>

<pallas_src>
import functools
import math

import jax
import jax.numpy as jnp
from jax.experimental import pallas as pl
from jax.experimental.pallas import tpu as pltpu


# Same as ogb.utils.features.get_bond_feature_dims()
def get_bond_feature_dims():
    return [5, 6, 2]


def edge_encoder_kernel(idx_ref, tab_ref, out_ref, *, offsets, chunk):
    """idx_ref: (F, TE) int32 raw bond-feature indices (edges on lanes)
       tab_ref: (H, D_total) f32 transposed stacked embedding table
       out_ref: (H, TE) out dtype (edges on lanes)
       offsets: static per-feature row offsets into the stacked table
       chunk:   static lane-chunk size (divides TE) bounding vreg pressure
    """
    te = out_ref.shape[1]
    d_total = tab_ref.shape[1]
    n_feat = idx_ref.shape[0]
    n_chunks = te // chunk

    tab = tab_ref[...]  # (H, D_total), resident, hoisted out of the loop
    iota = jax.lax.broadcasted_iota(jnp.int32, (d_total, chunk), 0)

    for c in range(n_chunks):  # static, small
        lo, hi = c * chunk, (c + 1) * chunk
        # Multi-hot (D_total, chunk): one 1.0 per feature row, per edge lane.
        multihot = jnp.zeros((d_total, chunk), dtype=jnp.float32)
        for f in range(n_feat):  # F is tiny and static
            row = idx_ref[f:f + 1, lo:hi] + offsets[f]      # (1, chunk)
            multihot = multihot + (row == iota).astype(jnp.float32)
        # (H, D_total) @ (D_total, chunk): MXU N = chunk (lane-dense),
        # exactly the sum of per-feature embedding gathers by linearity.
        out_ref[:, lo:hi] = jnp.dot(
            tab, multihot, preferred_element_type=jnp.float32
        ).astype(out_ref.dtype)


def example_edge_encoder(edge_feature, tables, *, tile_e=1024,
                         out_dtype=jnp.float32):
    """edge_feature: (E, F) integer features; tables: list of (dim_f, H) f32.

    Returns (E, H) = sum_f tables[f][edge_feature[:, f]].
    """
    dims = [int(t.shape[0]) for t in tables]
    emb_dim = int(tables[0].shape[1])
    E, F = edge_feature.shape
    assert F == len(tables)

    # Static per-feature row offsets into the stacked table (plain Python).
    offsets, acc = [], 0
    for d in dims:
        offsets.append(acc)
        acc += d
    offsets = tuple(offsets)

    # Stacked, transposed table: (H, D_total).
    stacked_t = jnp.concatenate(tables, axis=0).T
    d_total = int(stacked_t.shape[1])

    # Tile sizing: lane-aligned, clamped to the padded edge count.
    tile_e = max(128, (int(tile_e) // 128) * 128)
    tile_e = min(tile_e, pl.cdiv(E, 128) * 128)
    e_pad = pl.cdiv(E, tile_e) * tile_e
    chunk = tile_e if tile_e <= 512 else math.gcd(tile_e, 512)

    # Indices transposed to (F, E_pad) so edges ride the 128-lane axis.
    idx_t = edge_feature.astype(jnp.int32).T
    if e_pad != E:
        # Padded edges produce garbage rows that are sliced off below.
        idx_t = jnp.pad(idx_t, ((0, 0), (0, e_pad - E)), constant_values=0)

    kernel = functools.partial(edge_encoder_kernel,
                               offsets=offsets, chunk=chunk)

    out_t = pl.pallas_call(
        kernel,
        out_shape=jax.ShapeDtypeStruct((emb_dim, e_pad), out_dtype),
        grid_spec=pltpu.PrefetchScalarGridSpec(
            num_scalar_prefetch=0,
            grid=(e_pad // tile_e,),
            in_specs=[
                pl.BlockSpec((F, tile_e), lambda i: (0, i)),
                pl.BlockSpec((emb_dim, d_total), lambda i: (0, 0)),
            ],
            out_specs=pl.BlockSpec((emb_dim, tile_e), lambda i: (0, i)),
        ),
        compiler_params=pltpu.CompilerParams(
            dimension_semantics=("parallel",)
        ),
    )(idx_t, stacked_t)

    return out_t.T[:E]  # (E, H)


def _xavier_uniform(key, fan_in, fan_out):
    # torch.nn.init.xavier_uniform_ on an Embedding weight of shape (dim, emb)
    bound = (6.0 / (fan_in + fan_out)) ** 0.5
    return jax.random.uniform(
        key, (fan_in, fan_out), minval=-bound, maxval=bound, dtype=jnp.float32
    )


if __name__ == "__main__":
    key = jax.random.PRNGKey(0)
    emb_dim = 32
    num_edges = 64
    dims = get_bond_feature_dims()  # [5, 6, 2]

    # Deterministic parameter init (one embedding table per bond feature).
    keys = jax.random.split(key, len(dims) + 1)
    tables = [
        _xavier_uniform(keys[i], d, emb_dim) for i, d in enumerate(dims)
    ]

    # Synthetic batch.edge_feature: (E, F) integer bond features.
    col_keys = jax.random.split(keys[-1], len(dims))
    edge_feature = jnp.stack(
        [
            jax.random.randint(col_keys[i], (num_edges,), 0, d, dtype=jnp.int32)
            for i, d in enumerate(dims)
        ],
        axis=1,
    )  # (E, F)

    out = example_edge_encoder(edge_feature, tables)
    out = jax.block_until_ready(out)

    # Reference (plain JAX embedding-gather sum), shape/semantics check.
    ref = jnp.zeros((num_edges, emb_dim), jnp.float32)
    for i, t in enumerate(tables):
        ref = ref + jnp.take(t, edge_feature[:, i], axis=0)
    assert out.shape == (num_edges, emb_dim)
    assert jnp.allclose(out, ref, atol=1e-5, rtol=1e-5)

    print("KERNEL_OK")
</pallas_src>

<mosaic_0001>
module attributes {stable_mosaic.version = 11 : i64} {
  func.func @edge_encoder_kernel(%arg0: i32, %arg1: memref<3x128xi32, #tpu.memory_space<vmem>>, %arg2: memref<32x13xf32, #tpu.memory_space<vmem>>, %arg3: memref<32x128xf32, #tpu.memory_space<vmem>>) attributes {dimension_semantics = [#tpu.dimension_semantics<parallel>], iteration_bounds = array<i64: 1>, scalar_prefetch = 0 : i64, scratch_operands = 0 : i64, tpu.core_type = #tpu.core_type<tc>, window_params = [{transform_indices = @transform_0, window_bounds = array<i64: 3, 128>}, {pipeline_mode = #tpu.pipeline_mode<synchronous>, transform_indices = @transform_1, window_bounds = array<i64: 32, 13>}, {transform_indices = @transform_2, window_bounds = array<i64: 32, 128>}]} {
    %c0 = arith.constant 0 : index
    %c0_0 = arith.constant 0 : index
    %0 = vector.load %arg2[%c0, %c0_0] : memref<32x13xf32, #tpu.memory_space<vmem>>, vector<32x13xf32>
    %1 = tpu.iota {dimensions = array<i32: 0>} : vector<13x128xi32>
    %cst = arith.constant 0.000000e+00 : f32
    %2 = vector.broadcast %cst : f32 to vector<13x128xf32>
    %c0_1 = arith.constant 0 : index
    %c0_2 = arith.constant 0 : index
    %3 = vector.load %arg1[%c0_1, %c0_2] : memref<3x128xi32, #tpu.memory_space<vmem>>, vector<1x128xi32>
    %c0_i32 = arith.constant 0 : i32
    %4 = vector.broadcast %c0_i32 : i32 to vector<1x128xi32>
    %5 = arith.addi %3, %4 : vector<1x128xi32>
    %6 = vector.broadcast %5 : vector<1x128xi32> to vector<13x128xi32>
    %7 = arith.cmpi eq, %6, %1 : vector<13x128xi32>
    %8 = arith.extui %7 : vector<13x128xi1> to vector<13x128xi32>
    %9 = arith.sitofp %8 : vector<13x128xi32> to vector<13x128xf32>
    %10 = arith.addf %2, %9 : vector<13x128xf32>
    %c1 = arith.constant 1 : index
    %c0_3 = arith.constant 0 : index
    %11 = vector.load %arg1[%c1, %c0_3] : memref<3x128xi32, #tpu.memory_space<vmem>>, vector<1x128xi32>
    %c5_i32 = arith.constant 5 : i32
    %12 = vector.broadcast %c5_i32 : i32 to vector<1x128xi32>
    %13 = arith.addi %11, %12 : vector<1x128xi32>
    %14 = vector.broadcast %13 : vector<1x128xi32> to vector<13x128xi32>
    %15 = arith.cmpi eq, %14, %1 : vector<13x128xi32>
    %16 = arith.extui %15 : vector<13x128xi1> to vector<13x128xi32>
    %17 = arith.sitofp %16 : vector<13x128xi32> to vector<13x128xf32>
    %18 = arith.addf %10, %17 : vector<13x128xf32>
    %c2 = arith.constant 2 : index
    %c0_4 = arith.constant 0 : index
    %19 = vector.load %arg1[%c2, %c0_4] : memref<3x128xi32, #tpu.memory_space<vmem>>, vector<1x128xi32>
    %c11_i32 = arith.constant 11 : i32
    %20 = vector.broadcast %c11_i32 : i32 to vector<1x128xi32>
    %21 = arith.addi %19, %20 : vector<1x128xi32>
    %22 = vector.broadcast %21 : vector<1x128xi32> to vector<13x128xi32>
    %23 = arith.cmpi eq, %22, %1 : vector<13x128xi32>
    %24 = arith.extui %23 : vector<13x128xi1> to vector<13x128xi32>
    %25 = arith.sitofp %24 : vector<13x128xi32> to vector<13x128xf32>
    %26 = arith.addf %18, %25 : vector<13x128xf32>
    %cst_5 = arith.constant dense<0.000000e+00> : vector<32x128xf32>
    %27 = tpu.matmul %0, %26, %cst_5 {dimension_numbers = #tpu.dot_dimension_numbers<[1], [0], [0], [1], [0, 0, 1, 1], [], []>} : vector<32x13xf32>, vector<13x128xf32>, vector<32x128xf32> -> vector<32x128xf32>
    %c0_6 = arith.constant 0 : index
    %c0_7 = arith.constant 0 : index
    %28 = vector.load %arg3[%c0_6, %c0_7] : memref<32x128xf32, #tpu.memory_space<vmem>>, vector<32x128xf32>
    tpu.vector_store %arg3[%c0_6, %c0_7], %27 {strides = array<i32>} : memref<32x128xf32, #tpu.memory_space<vmem>>, vector<32x128xf32>,
    return
  }
  func.func @transform_0(%arg0: i32) -> (i32, i32) {
    %c0_i32 = arith.constant 0 : i32
    %c0_i32_0 = arith.constant 0 : i32
    return %c0_i32, %arg0 : i32, i32
  }
  func.func @transform_1(%arg0: i32) -> (i32, i32) {
    %c0_i32 = arith.constant 0 : i32
    %c0_i32_0 = arith.constant 0 : i32
    %c0_i32_1 = arith.constant 0 : i32
    return %c0_i32, %c0_i32_0 : i32, i32
  }
  func.func @transform_2(%arg0: i32) -> (i32, i32) {
    %c0_i32 = arith.constant 0 : i32
    %c0_i32_0 = arith.constant 0 : i32
    return %c0_i32, %arg0 : i32, i32
  }
}

</mosaic_0001>

<llo_original>
// kernel: tpu_custom_call.1
$region0: #{tpu_custom_call.1}
  #allocation0 [shape = 'u32[]', space=smem, size = 0x4, offset = 0x4, fixed_abs, tag = 'smem constant byte address 0x4 - core index']
  #allocation1 [shape = 'u32[144,128]{1,0:T(1,128)}', space=vmem, size = 0x12000, scoped, tag = 'internal scratch']
  %s0 = inlined_call_operand.vmem [shape: s32[3,128], index: 0, kind: input, shape index: {}]
  %s1 = inlined_call_operand.vmem [shape: f32[32,13], index: 1, kind: input, shape index: {}]
  %s2 = inlined_call_operand.hbm [shape: f32[32,128], index: 2, kind: output, shape index: {}]
  %s3 = sld [smem:[#allocation0]]
  $region18: #{tpu_custom_call.1} parent=0
    _
  %s5 = ssub.s32 1, %s3
  %s6 = scalar_select 0, %s5, %s3
  $region1: #{tpu_custom_call.1} parent=0
    #allocation2 [shape = 'u8[16384]{0}', space=vmem, size = 0x4000, scoped, tag = 'output window, operand 0, single buffered']
    #allocation3 [shape = 's32[1]{0}', space=sflag, size = 0x4, scoped, tag = 'scoped memory for tpu_custom_call.1']
    %7 = vsyncpa [#allocation3], 0
    // Predicated region
    $region2: #{tpu_custom_call.1} parent=1 // pred_check
      _
    $region3: #{tpu_custom_call.1} parent=1 // pred_check_branch
      %9 = sbr.rel (0) target = $region5
    $region4: #{tpu_custom_call.1} parent=1 // pred_region
      _
    $region5: #{tpu_custom_call.1} parent=1 // pred_fallthru
      _
    // Predicated region
    $region6: #{tpu_custom_call.1} parent=1 // pred_check
      _
    $region7: #{tpu_custom_call.1} parent=1 // pred_check_branch
      %11 = sbr.rel (0) target = $region9
    $region8: #{tpu_custom_call.1} parent=1 // pred_region
      _
    $region9: #{tpu_custom_call.1} parent=1 // pred_fallthru
      _
    %v12 = vld [vmem:[%s1] sm:$0xff]
    %v13 = vld [vmem:[%s1 + $0x8] sm:$0xff]
    %v14 = vld [vmem:[%s1 + $0x10] sm:$0xff]
    %v15 = vld [vmem:[%s1 + $0x18] sm:$0xff]
    %v16 = vlaneseq
    %v17 = vshrl.u32 %v16, 7
    %v18 = vadd.s32 %v17, 8
    %v19 = vld [vmem:[%s0] sm:$0x1]
    %v20 = vlaneseq
    %v21 = vshrl.u32 %v20, 7
    %v22 = vsub.s32 0, %v21
    %v23 = vrot.slane %v19, %v22
    %vm24 = vcmp.eq.s32.totalorder %v23, %v17
    %vm25 = vcmp.eq.s32.totalorder %v23, %v18
    %v26 = vsel %vm24, 1, 0
    %v27 = vsel %vm25, 1, 0
    %v28 = vcvt.s32.f32 %v26
    %v29 = vcvt.s32.f32 %v27
    %v30 = vadd.f32 %v28, 0.0
    %v31 = vadd.f32 %v29, 0.0
    %v32 = vld [vmem:[%s0 + $0x1] sm:$0x1]
    %v33 = vadd.s32 %v32, 5
    %v34 = vlaneseq
    %v35 = vshrl.u32 %v34, 7
    %v36 = vsub.s32 0, %v35
    %v37 = vrot.slane %v33, %v36
    %vm38 = vcmp.eq.s32.totalorder %v37, %v17
    %vm39 = vcmp.eq.s32.totalorder %v37, %v18
    %v40 = vsel %vm38, 1, 0
    %v41 = vsel %vm39, 1, 0
    %v42 = vcvt.s32.f32 %v40
    %v43 = vcvt.s32.f32 %v41
    %v44 = vadd.f32 %v30, %v42
    %v45 = vadd.f32 %v31, %v43
    %v46 = vld [vmem:[%s0 + $0x2] sm:$0x1]
    %v47 = vadd.s32 %v46, 11
    %v48 = vlaneseq
    %v49 = vshrl.u32 %v48, 7
    %v50 = vsub.s32 0, %v49
    %v51 = vrot.slane %v47, %v50
    %vm52 = vcmp.eq.s32.totalorder %v51, %v17
    %vm53 = vcmp.eq.s32.totalorder %v51, %v18
    %v54 = vsel %vm52, 1, 0
    %v55 = vsel %vm53, 1, 0
    %v56 = vcvt.s32.f32 %v54
    %v57 = vcvt.s32.f32 %v55
    %v58 = vadd.f32 %v44, %v56
    %v59 = vadd.f32 %v45, %v57
    %vm60 = vcmask 105472
    %v62 = vsel %vm60, %v12, 0
    %v65 = vsel %vm60, %v13, 0
    %v68 = vsel %vm60, %v14, 0
    %v71 = vsel %vm60, %v15, 0
    %vm73 = vcmask 1044480
    %v75 = vsel %vm73, %v59, 0
    %77 = vmatprep.subr.mxu0 0.0
    %78 = vmatpush1.msra.mxu0 %v58
    %79 = vmatprep.subr.mxu0 0.0
    %80 = vmatpush1.msra.mxu0 %v75
    %81 = vmatprep.subr.mxu0 0.0
    %82 = vmatpush1.msra.mxu0 0.0
    %83 = vmatprep.subr.mxu0 0.0
    %84 = vmatpush1.msra.mxu0 0.0
    %85 = vmatprep.subr.mxu0 0.0
    %86 = vmatpush1.msra.mxu0 0.0
    %87 = vmatprep.subr.mxu0 0.0
    %88 = vmatpush1.msra.mxu0 0.0
    %89 = vmatprep.subr.mxu0 0.0
    %90 = vmatpush1.msra.mxu0 0.0
    %91 = vmatprep.subr.mxu0 0.0
    %92 = vmatpush1.msra.mxu0 0.0
    %93 = vmatprep.subr.mxu0 0.0
    %94 = vmatpush1.msra.mxu0 0.0
    %95 = vmatprep.subr.mxu0 0.0
    %96 = vmatpush1.msra.mxu0 0.0
    %97 = vmatprep.subr.mxu0 0.0
    %98 = vmatpush1.msra.mxu0 0.0
    %99 = vmatprep.subr.mxu0 0.0
    %100 = vmatpush1.msra.mxu0 0.0
    %101 = vmatprep.subr.mxu0 0.0
    %102 = vmatpush1.msra.mxu0 0.0
    %103 = vmatprep.subr.mxu0 0.0
    %104 = vmatpush1.msra.mxu0 0.0
    %105 = vmatprep.subr.mxu0 0.0
    %106 = vmatpush1.msra.mxu0 0.0
    %107 = vmatprep.subr.mxu0 0.0
    %108 = vmatpush1.msra.mxu0 0.0
    %109 = vmatprep.subr.mxu0 0.0
    %110 = vmatpush1.msra.mxu0 0.0
    %111 = vmatprep.subr.mxu0 0.0
    %112 = vmatpush1.msra.mxu0 0.0
    %113 = vmatprep.subr.mxu0 0.0
    %114 = vmatpush1.msra.mxu0 0.0
    %115 = vmatprep.subr.mxu0 0.0
    %116 = vmatpush1.msra.mxu0 0.0
    %117 = vmatprep.subr.mxu0 0.0
    %118 = vmatpush1.msra.mxu0 0.0
    %119 = vmatprep.subr.mxu0 0.0
    %120 = vmatpush1.msra.mxu0 0.0
    %121 = vmatprep.subr.mxu0 0.0
    %122 = vmatpush1.msra.mxu0 0.0
    %123 = vmatprep.subr.mxu0 0.0
    %124 = vmatpush1.msra.mxu0 0.0
    %125 = vmatprep.subr.mxu0 0.0
    %126 = vmatpush1.msra.mxu0 0.0
    %127 = vmatprep.subr.mxu0 0.0
    %128 = vmatpush1.msra.mxu0 0.0
    %129 = vmatprep.subr.mxu0 0.0
    %130 = vmatpush1.msra.mxu0 0.0
    %131 = vmatprep.subr.mxu0 0.0
    %132 = vmatpush1.msra.mxu0 0.0
    %133 = vmatprep.subr.mxu0 0.0
    %134 = vmatpush1.msra.mxu0 0.0
    %135 = vmatprep.subr.mxu0 0.0
    %136 = vmatpush1.msra.mxu0 0.0
    %137 = vmatprep.subr.mxu0 0.0
    %138 = vmatpush1.msra.mxu0 0.0
    %139 = vmatprep.subr.mxu0 0.0
    %140 = vmatpush1.msra.mxu0 0.0
    %141 = vmatprep.mubr.f32.mxu0 0.0
    %142 = vmatmul.mubr.f32.gmra.mrb[0].mxu0 %v62
    %v143 = vpop.f32.mrb[0].mxu0
    %v144 = vadd.f32 0.0, %v143
    %v145 = vpop.f32.mrb[0].mxu0
    %146 = vmatprep.mubr.f32.mxu0 0.0
    %147 = vmatmul.mubr.f32.gmra.mrb[0].mxu0 %v65
    %v148 = vpop.f32.mrb[0].mxu0
    %v149 = vadd.f32 0.0, %v148
    %v150 = vpop.f32.mrb[0].mxu0
    %151 = vmatprep.mubr.f32.mxu0 0.0
    %152 = vmatmul.mubr.f32.gmra.mrb[0].mxu0 %v68
    %v153 = vpop.f32.mrb[0].mxu0
    %v154 = vadd.f32 0.0, %v153
    %v155 = vpop.f32.mrb[0].mxu0
    %156 = vmatprep.mubr.f32.mxu0 0.0
    %157 = vmatmul.mubr.f32.gmra.mrb[0].mxu0 %v71
    %v158 = vpop.f32.mrb[0].mxu0
    %v159 = vadd.f32 0.0, %v158
    %v160 = vpop.f32.mrb[0].mxu0
    %161 = vdwg.mxu0
    %162 = vst [vmem:[#allocation2] sm:$0xff] %v144
    %163 = vst [vmem:[#allocation2 + $0x8] sm:$0xff] %v149
    %164 = vst [vmem:[#allocation2 + $0x10] sm:$0xff] %v154
    %165 = vst [vmem:[#allocation2 + $0x18] sm:$0xff] %v159
    // Predicated region
    $region10: #{tpu_custom_call.1} parent=1 // pred_check
      _
    $region11: #{tpu_custom_call.1} parent=1 // pred_check_branch
      %167 = sbr.rel (0) target = $region13
    $region12: #{tpu_custom_call.1} parent=1 // pred_region
      %s169 = ssub.s32 512, 512
      %170 = vsyncadd [#allocation3], %s169
      %s171 = sshll.u32 [#allocation2], 4
      %s172 = int_to_ptr.vmem [resolvable:$true] %s171
      %177 = dma.vmem_to_hbm [thread:$0]  %s172, 512, %s2, [#allocation3], 128, 128, 8
    $region13: #{tpu_custom_call.1} parent=1 // pred_fallthru
      _
    // Predicated region
    $region14: #{tpu_custom_call.1} parent=1 // pred_check
      _
    $region15: #{tpu_custom_call.1} parent=1 // pred_check_branch
      %179 = sbr.rel (0) target = $region17
    $region16: #{tpu_custom_call.1} parent=1 // pred_region
      %180 = dma.done [#allocation3], 512
    $region17: #{tpu_custom_call.1} parent=1 // pred_fallthru
      _
    %181 = vsyncpa [#allocation3], 1

</llo_original>
